<compile_context>
chip_gen: v6e
topology: v6e:2x2x1
jax: 0.10.0
libtpu: 0.0.40
codegen_flags: <defaults>
</compile_context>

<pallas_src>
import jax
import jax.numpy as jnp
from jax.experimental import pallas as pl
from jax.experimental.pallas import tpu as pltpu

# ----------------------------------------------------------------------------
# Problem sizes (synthetic "data" object of DualNetEndToEnd)
# ----------------------------------------------------------------------------
BATCH = 2
XDIM = 16                       # data.xdim
N_LAYERS = 4
HIDDEN = int(5.0 * XDIM)        # hidden_size_factor * xdim = 80
NUM_G = 4                       # data.num_g
NUM_L = 6                       # data.num_l
NUM_N = 6                       # remaining "md_n" block
M_COLS = NUM_G + NUM_L + NUM_N  # columns of eq_cm / obj_coeff = 16
NEQ = 8                         # data.neq
BENDERS_COMPACT = False         # args['ED_args']['benders_compact']
OUT_DIM = (NUM_G + NEQ) if BENDERS_COMPACT else NEQ     # 8
OUT_TOTAL = 2 * M_COLS + OUT_DIM                        # 40  ([out_mu | lamb])
LN_EPS = 1e-5

# Lane-dense padded kernel dims
H_PAD = 128                     # hidden width padded 80 -> 128
OUT_PAD = 128                   # output width padded 40 -> 128

# Packed parameter-slab row offsets (all section starts are multiples of 8)
ROW_W0 = 0                      # (XDIM, H_PAD)
ROW_WMID = XDIM                 # 3 x (H_PAD, H_PAD)
ROW_WFIN = ROW_WMID + 3 * H_PAD # (H_PAD, OUT_PAD)
ROW_BIAS = ROW_WFIN + H_PAD     # rows: b0', b1, b2, b3, b_final, 3x zero
P_ROWS = ROW_BIAS + 8           # 536


def _round_up(x, m):
    return ((x + m - 1) // m) * m


def _cdiv(a, b):
    return -(-a // b)


# ----------------------------------------------------------------------------
# Kernel: LayerNorm stats -> 4x (Linear+ReLU) -> fused final Linear
#         -> lane-masked ReLU (complete_duals fully folded into W_final)
# ----------------------------------------------------------------------------
def dualnet_kernel(x_ref, p_ref, out_ref):
    x = x_ref[...]                                        # (TB, XDIM)

    # ---- LayerNorm statistics (affine folded into the first Linear) ----
    mean = jnp.mean(x, axis=-1, keepdims=True)
    cent = x - mean
    var = jnp.mean(cent * cent, axis=-1, keepdims=True)
    h = cent * jax.lax.rsqrt(var + LN_EPS)                # (TB, XDIM)

    # ---- first Linear (gamma/beta folded in) + ReLU ----
    h = jnp.maximum(
        jnp.dot(h, p_ref[ROW_W0:ROW_W0 + XDIM, :],
                preferred_element_type=jnp.float32)
        + p_ref[ROW_BIAS:ROW_BIAS + 1, :], 0.0)           # (TB, H_PAD)

    # ---- 3 hidden Linear + ReLU (static unroll, slab slices) ----
    for i in range(3):
        w = p_ref[ROW_WMID + i * H_PAD:ROW_WMID + (i + 1) * H_PAD, :]
        b = p_ref[ROW_BIAS + 1 + i:ROW_BIAS + 2 + i, :]
        h = jnp.maximum(
            jnp.dot(h, w, preferred_element_type=jnp.float32) + b, 0.0)

    # ---- fused final Linear:  y = h @ [w4@eq_ext | w4 | 0] + [b_mu | b4 | 0]
    y = (jnp.dot(h, p_ref[ROW_WFIN:ROW_WFIN + H_PAD, :],
                 preferred_element_type=jnp.float32)
         + p_ref[ROW_BIAS + 4:ROW_BIAS + 5, :])           # (TB, OUT_PAD)

    # complete_duals ReLU applies only to the mu lanes (first 2*M_COLS);
    # lanes [2*M_COLS, OUT_TOTAL) carry lamb untouched, the rest are zero.
    lane = jax.lax.broadcasted_iota(jnp.int32, y.shape, 1)
    out_ref[...] = jnp.where(lane < 2 * M_COLS, jnp.maximum(y, 0.0), y)


# ----------------------------------------------------------------------------
# Batch-tiling plan
# ----------------------------------------------------------------------------
def _num_tensorcores_per_chip():
    try:
        kind = jax.devices()[0].device_kind.lower()
        if "v7" in kind:
            return 2
    except Exception:
        pass
    return 1


def _tile_plan(B):
    if B <= 8:
        return B, B                       # single un-padded block, grid=(1,)
    max_tile = 512
    n_tiles = _cdiv(B, max_tile)
    if n_tiles == 1 and B >= 16 and _num_tensorcores_per_chip() >= 2:
        n_tiles = 2                       # keep both v7x TensorCores busy
    tb = _round_up(_cdiv(B, n_tiles), 8)
    bp = _round_up(B, tb)
    return tb, bp


# ----------------------------------------------------------------------------
# Wrapper
# ----------------------------------------------------------------------------
@jax.jit
def dualnet_forward(x, slab):
    B = x.shape[0]
    TB, Bp = _tile_plan(B)
    x_p = x if Bp == B else jnp.pad(x, ((0, Bp - B), (0, 0)))
    grid = (Bp // TB,)

    flops = 2 * Bp * (XDIM * H_PAD + 3 * H_PAD * H_PAD + H_PAD * OUT_PAD)
    bytes_accessed = 4 * (Bp * XDIM + Bp * OUT_PAD + P_ROWS * 128)

    out = pl.pallas_call(
        dualnet_kernel,
        out_shape=jax.ShapeDtypeStruct((Bp, OUT_PAD), jnp.float32),
        grid=grid,
        in_specs=[
            pl.BlockSpec((TB, XDIM), lambda i: (i, 0)),    # x (tiled over batch)
            pl.BlockSpec((P_ROWS, 128), lambda i: (0, 0)),  # packed params (resident)
        ],
        out_specs=pl.BlockSpec((TB, OUT_PAD), lambda i: (i, 0)),
        compiler_params=pltpu.CompilerParams(
            dimension_semantics=("parallel",)),
        cost_estimate=pl.CostEstimate(
            flops=flops, transcendentals=Bp, bytes_accessed=bytes_accessed),
    )(x_p, slab)

    mu = out[:B, :2 * M_COLS]
    lamb = out[:B, 2 * M_COLS:OUT_TOTAL]
    return mu, lamb


# ----------------------------------------------------------------------------
# Deterministic parameter construction (mirrors __init__ shapes)
# ----------------------------------------------------------------------------
def init_params(key):
    layer_sizes = [XDIM] + [HIDDEN] * N_LAYERS + [OUT_DIM]
    ws, bs = [], []
    for in_sz, out_sz in zip(layer_sizes[:-1], layer_sizes[1:]):
        key, kw, kb = jax.random.split(key, 3)
        # kaiming_normal_: std = gain / sqrt(fan_in), gain = sqrt(2)
        std = (2.0 / in_sz) ** 0.5
        w = std * jax.random.normal(kw, (in_sz, out_sz), jnp.float32)
        b = 0.01 * jax.random.normal(kb, (1, out_sz), jnp.float32)
        ws.append(w)
        bs.append(b)
    gamma = jnp.ones((1, XDIM), jnp.float32)   # nn.LayerNorm default affine
    beta = jnp.zeros((1, XDIM), jnp.float32)
    key, k1, k2 = jax.random.split(key, 3)
    eq_cm = jax.random.normal(k1, (OUT_DIM, M_COLS), jnp.float32)   # data.eq_cm
    obj_coeff = jax.random.normal(k2, (1, M_COLS), jnp.float32)     # data.obj_coeff
    return gamma, beta, ws, bs, eq_cm, obj_coeff


def pack_params(params):
    """Host-side, one-time packing: fold LN affine + complete_duals into the
    weights, zero-pad to lane-dense widths, and emit ONE (P_ROWS, 128) slab."""
    gamma, beta, ws, bs, eq_cm, obj_coeff = params
    w0, w1, w2, w3, w4 = ws
    b0, b1, b2, b3, b4 = bs

    # Fold LayerNorm elementwise-affine into the first Linear.
    w0f = gamma.T * w0                       # (XDIM, HIDDEN)
    b0f = b0 + beta @ w0                     # (1, HIDDEN)

    # Fold complete_duals into the last Linear.
    g0, g1 = 0, NUM_G
    l0, l1 = NUM_G, NUM_G + NUM_L
    n0 = NUM_G + NUM_L
    eg, el, en = eq_cm[:, g0:g1], eq_cm[:, l0:l1], eq_cm[:, n0:]
    og, ol, on = obj_coeff[:, g0:g1], obj_coeff[:, l0:l1], obj_coeff[:, n0:]
    eq_ext = jnp.concatenate([eg, -eg, el, -el, en, -en], axis=1)   # (OUT_DIM, 2M)
    obj_ext = jnp.concatenate([og, -og, ol, -ol, on, -on], axis=1)  # (1, 2M)
    w_final = jnp.concatenate([w4 @ eq_ext, w4], axis=1)            # (HIDDEN, 40)
    b_final = jnp.concatenate([obj_ext + b4 @ eq_ext, b4], axis=1)  # (1, 40)

    def padc(a, cols):
        return jnp.pad(a, ((0, 0), (0, cols - a.shape[1])))

    def padrc(a, rows, cols):
        return jnp.pad(a, ((0, rows - a.shape[0]), (0, cols - a.shape[1])))

    pieces = [padc(w0f, H_PAD)]                              # rows   0..15
    for w in (w1, w2, w3):
        pieces.append(padrc(w, H_PAD, H_PAD))                # rows  16..399
    pieces.append(padrc(w_final, H_PAD, OUT_PAD))            # rows 400..527
    bias_rows = jnp.concatenate([
        padc(b0f, H_PAD), padc(b1, H_PAD), padc(b2, H_PAD), padc(b3, H_PAD),
        padc(b_final, OUT_PAD),
        jnp.zeros((3, 128), jnp.float32),
    ], axis=0)                                               # rows 528..535
    pieces.append(bias_rows)
    slab = jnp.concatenate(pieces, axis=0)                   # (P_ROWS, 128)
    assert slab.shape == (P_ROWS, 128)
    return slab


# ----------------------------------------------------------------------------
# Pure-JAX reference (mirrors the torch forward exactly)
# ----------------------------------------------------------------------------
def reference_forward(x, params):
    gamma, beta, ws, bs, eq_cm, obj_coeff = params
    mean = jnp.mean(x, axis=-1, keepdims=True)
    var = jnp.mean((x - mean) ** 2, axis=-1, keepdims=True)
    h = (x - mean) / jnp.sqrt(var + LN_EPS) * gamma + beta
    for i, (w, b) in enumerate(zip(ws, bs)):
        h = h @ w + b
        if i < len(ws) - 1:
            h = jnp.maximum(h, 0.0)
    lamb = h
    mu = obj_coeff + lamb @ eq_cm
    mu_lb = jnp.maximum(mu, 0.0)
    mu_ub = jnp.maximum(-mu, 0.0)
    out_mu = jnp.concatenate(
        [
            mu_lb[:, :NUM_G], mu_ub[:, :NUM_G],
            mu_lb[:, NUM_G:NUM_G + NUM_L], mu_ub[:, NUM_G:NUM_G + NUM_L],
            mu_lb[:, NUM_G + NUM_L:], mu_ub[:, NUM_G + NUM_L:],
        ],
        axis=1,
    )
    return out_mu, lamb


if __name__ == "__main__":
    key = jax.random.PRNGKey(0)
    key, kx = jax.random.split(key)
    x = jax.random.normal(kx, (BATCH, XDIM), jnp.float32)
    params = init_params(key)
    slab = pack_params(params)

    mu, lamb = dualnet_forward(x, slab)
    jax.block_until_ready((mu, lamb))

    ref_mu, ref_lamb = reference_forward(x, params)
    assert mu.shape == (BATCH, 2 * M_COLS) and lamb.shape == (BATCH, OUT_DIM)
    assert jnp.allclose(mu, ref_mu, atol=1e-4, rtol=1e-4)
    assert jnp.allclose(lamb, ref_lamb, atol=1e-4, rtol=1e-4)
    print("KERNEL_OK")
</pallas_src>

<mosaic_0001>
module attributes {stable_mosaic.version = 11 : i64} {
  func.func @dualnet_kernel(%arg0: i32, %arg1: memref<2x16xf32, #tpu.memory_space<vmem>>, %arg2: memref<536x128xf32, #tpu.memory_space<vmem>>, %arg3: memref<2x128xf32, #tpu.memory_space<vmem>>) attributes {dimension_semantics = [#tpu.dimension_semantics<parallel>], iteration_bounds = array<i64: 1>, scalar_prefetch = 0 : i64, scratch_operands = 0 : i64, tpu.core_type = #tpu.core_type<tc>, window_params = [{transform_indices = @transform_0, window_bounds = array<i64: 2, 16>}, {pipeline_mode = #tpu.pipeline_mode<synchronous>, transform_indices = @transform_1, window_bounds = array<i64: 536, 128>}, {transform_indices = @transform_2, window_bounds = array<i64: 2, 128>}]} {
    %c0 = arith.constant 0 : index
    %c0_0 = arith.constant 0 : index
    %0 = vector.load %arg1[%c0, %c0_0] : memref<2x16xf32, #tpu.memory_space<vmem>>, vector<2x16xf32>
    %cst = arith.constant dense<0.000000e+00> : vector<2xf32>
    %1 = vector.multi_reduction <add>, %0, %cst [1] : vector<2x16xf32> to vector<2xf32>
    %2 = vector.shape_cast %1 : vector<2xf32> to vector<2x1xf32>
    %cst_1 = arith.constant 1.600000e+01 : f32
    %3 = vector.broadcast %cst_1 : f32 to vector<2x1xf32>
    %4 = arith.divf %2, %3 : vector<2x1xf32>
    %5 = vector.broadcast %4 : vector<2x1xf32> to vector<2x16xf32>
    %6 = arith.subf %0, %5 : vector<2x16xf32>
    %7 = arith.mulf %6, %6 : vector<2x16xf32>
    %cst_2 = arith.constant dense<0.000000e+00> : vector<2xf32>
    %8 = vector.multi_reduction <add>, %7, %cst_2 [1] : vector<2x16xf32> to vector<2xf32>
    %9 = vector.shape_cast %8 : vector<2xf32> to vector<2x1xf32>
    %cst_3 = arith.constant 1.600000e+01 : f32
    %10 = vector.broadcast %cst_3 : f32 to vector<2x1xf32>
    %11 = arith.divf %9, %10 : vector<2x1xf32>
    %cst_4 = arith.constant 9.99999974E-6 : f32
    %12 = vector.broadcast %cst_4 : f32 to vector<2x1xf32>
    %13 = arith.addf %11, %12 : vector<2x1xf32>
    %14 = math.rsqrt %13 : vector<2x1xf32>
    %15 = vector.broadcast %14 : vector<2x1xf32> to vector<2x16xf32>
    %16 = arith.mulf %6, %15 : vector<2x16xf32>
    %c0_5 = arith.constant 0 : index
    %c0_6 = arith.constant 0 : index
    %17 = vector.load %arg2[%c0_5, %c0_6] : memref<536x128xf32, #tpu.memory_space<vmem>>, vector<16x128xf32>
    %cst_7 = arith.constant dense<0.000000e+00> : vector<2x128xf32>
    %18 = tpu.matmul %16, %17, %cst_7 {dimension_numbers = #tpu.dot_dimension_numbers<[1], [0], [0], [1], [0, 0, 1, 1], [], []>} : vector<2x16xf32>, vector<16x128xf32>, vector<2x128xf32> -> vector<2x128xf32>
    %c528 = arith.constant 528 : index
    %c0_8 = arith.constant 0 : index
    %19 = vector.load %arg2[%c528, %c0_8] : memref<536x128xf32, #tpu.memory_space<vmem>>, vector<1x128xf32>
    %20 = vector.broadcast %19 : vector<1x128xf32> to vector<2x128xf32>
    %21 = arith.addf %18, %20 : vector<2x128xf32>
    %cst_9 = arith.constant 0.000000e+00 : f32
    %22 = vector.broadcast %cst_9 : f32 to vector<2x128xf32>
    %23 = arith.maximumf %21, %22 : vector<2x128xf32>
    %c16 = arith.constant 16 : index
    %c0_10 = arith.constant 0 : index
    %24 = vector.load %arg2[%c16, %c0_10] : memref<536x128xf32, #tpu.memory_space<vmem>>, vector<128x128xf32>
    %c529 = arith.constant 529 : index
    %c0_11 = arith.constant 0 : index
    %25 = vector.load %arg2[%c529, %c0_11] : memref<536x128xf32, #tpu.memory_space<vmem>>, vector<1x128xf32>
    %cst_12 = arith.constant dense<0.000000e+00> : vector<2x128xf32>
    %26 = tpu.matmul %23, %24, %cst_12 {dimension_numbers = #tpu.dot_dimension_numbers<[1], [0], [0], [1], [0, 0, 1, 1], [], []>} : vector<2x128xf32>, vector<128x128xf32>, vector<2x128xf32> -> vector<2x128xf32>
    %27 = vector.broadcast %25 : vector<1x128xf32> to vector<2x128xf32>
    %28 = arith.addf %26, %27 : vector<2x128xf32>
    %cst_13 = arith.constant 0.000000e+00 : f32
    %29 = vector.broadcast %cst_13 : f32 to vector<2x128xf32>
    %30 = arith.maximumf %28, %29 : vector<2x128xf32>
    %c144 = arith.constant 144 : index
    %c0_14 = arith.constant 0 : index
    %31 = vector.load %arg2[%c144, %c0_14] : memref<536x128xf32, #tpu.memory_space<vmem>>, vector<128x128xf32>
    %c530 = arith.constant 530 : index
    %c0_15 = arith.constant 0 : index
    %32 = vector.load %arg2[%c530, %c0_15] : memref<536x128xf32, #tpu.memory_space<vmem>>, vector<1x128xf32>
    %cst_16 = arith.constant dense<0.000000e+00> : vector<2x128xf32>
    %33 = tpu.matmul %30, %31, %cst_16 {dimension_numbers = #tpu.dot_dimension_numbers<[1], [0], [0], [1], [0, 0, 1, 1], [], []>} : vector<2x128xf32>, vector<128x128xf32>, vector<2x128xf32> -> vector<2x128xf32>
    %34 = vector.broadcast %32 : vector<1x128xf32> to vector<2x128xf32>
    %35 = arith.addf %33, %34 : vector<2x128xf32>
    %cst_17 = arith.constant 0.000000e+00 : f32
    %36 = vector.broadcast %cst_17 : f32 to vector<2x128xf32>
    %37 = arith.maximumf %35, %36 : vector<2x128xf32>
    %c272 = arith.constant 272 : index
    %c0_18 = arith.constant 0 : index
    %38 = vector.load %arg2[%c272, %c0_18] : memref<536x128xf32, #tpu.memory_space<vmem>>, vector<128x128xf32>
    %c531 = arith.constant 531 : index
    %c0_19 = arith.constant 0 : index
    %39 = vector.load %arg2[%c531, %c0_19] : memref<536x128xf32, #tpu.memory_space<vmem>>, vector<1x128xf32>
    %cst_20 = arith.constant dense<0.000000e+00> : vector<2x128xf32>
    %40 = tpu.matmul %37, %38, %cst_20 {dimension_numbers = #tpu.dot_dimension_numbers<[1], [0], [0], [1], [0, 0, 1, 1], [], []>} : vector<2x128xf32>, vector<128x128xf32>, vector<2x128xf32> -> vector<2x128xf32>
    %41 = vector.broadcast %39 : vector<1x128xf32> to vector<2x128xf32>
    %42 = arith.addf %40, %41 : vector<2x128xf32>
    %cst_21 = arith.constant 0.000000e+00 : f32
    %43 = vector.broadcast %cst_21 : f32 to vector<2x128xf32>
    %44 = arith.maximumf %42, %43 : vector<2x128xf32>
    %c400 = arith.constant 400 : index
    %c0_22 = arith.constant 0 : index
    %45 = vector.load %arg2[%c400, %c0_22] : memref<536x128xf32, #tpu.memory_space<vmem>>, vector<128x128xf32>
    %cst_23 = arith.constant dense<0.000000e+00> : vector<2x128xf32>
    %46 = tpu.matmul %44, %45, %cst_23 {dimension_numbers = #tpu.dot_dimension_numbers<[1], [0], [0], [1], [0, 0, 1, 1], [], []>} : vector<2x128xf32>, vector<128x128xf32>, vector<2x128xf32> -> vector<2x128xf32>
    %c532 = arith.constant 532 : index
    %c0_24 = arith.constant 0 : index
    %47 = vector.load %arg2[%c532, %c0_24] : memref<536x128xf32, #tpu.memory_space<vmem>>, vector<1x128xf32>
    %48 = vector.broadcast %47 : vector<1x128xf32> to vector<2x128xf32>
    %49 = arith.addf %46, %48 : vector<2x128xf32>
    %50 = tpu.iota {dimensions = array<i32: 1>} : vector<2x128xi32>
    %c32_i32 = arith.constant 32 : i32
    %51 = vector.broadcast %c32_i32 : i32 to vector<2x128xi32>
    %52 = arith.cmpi slt, %50, %51 : vector<2x128xi32>
    %cst_25 = arith.constant 0.000000e+00 : f32
    %53 = vector.broadcast %cst_25 : f32 to vector<2x128xf32>
    %54 = arith.maximumf %49, %53 : vector<2x128xf32>
    %55 = arith.select %52, %54, %49 : vector<2x128xi1>, vector<2x128xf32>
    %c0_26 = arith.constant 0 : index
    %c0_27 = arith.constant 0 : index
    %56 = vector.load %arg3[%c0_26, %c0_27] : memref<2x128xf32, #tpu.memory_space<vmem>>, vector<2x128xf32>
    tpu.vector_store %arg3[%c0_26, %c0_27], %55 {strides = array<i32>} : memref<2x128xf32, #tpu.memory_space<vmem>>, vector<2x128xf32>,
    return
  }
  func.func @transform_0(%arg0: i32) -> (i32, i32) {
    %c0_i32 = arith.constant 0 : i32
    %c0_i32_0 = arith.constant 0 : i32
    return %arg0, %c0_i32 : i32, i32
  }
  func.func @transform_1(%arg0: i32) -> (i32, i32) {
    %c0_i32 = arith.constant 0 : i32
    %c0_i32_0 = arith.constant 0 : i32
    %c0_i32_1 = arith.constant 0 : i32
    return %c0_i32, %c0_i32_0 : i32, i32
  }
  func.func @transform_2(%arg0: i32) -> (i32, i32) {
    %c0_i32 = arith.constant 0 : i32
    %c0_i32_0 = arith.constant 0 : i32
    return %arg0, %c0_i32 : i32, i32
  }
}

</mosaic_0001>

<llo_original>
// kernel: dualnet_forward.1
$region0: #{dualnet_forward.1}
  #allocation0 [shape = 'u32[]', space=smem, size = 0x4, offset = 0x4, fixed_abs, tag = 'smem constant byte address 0x4 - core index']
  #allocation1 [shape = 'u32[144,128]{1,0:T(1,128)}', space=vmem, size = 0x12000, scoped, tag = 'internal scratch']
  %s0 = inlined_call_operand.hbm [shape: f32[2,16], index: 0, kind: input, shape index: {}]
  %s1 = inlined_call_operand.hbm [shape: f32[536,128], index: 1, kind: input, shape index: {}]
  %s2 = inlined_call_operand.vmem [shape: f32[2,128], index: 2, kind: output, shape index: {}]
  %s3 = sld [smem:[#allocation0]]
  $region26: #{dualnet_forward.1} parent=0
    _
  %s5 = ssub.s32 1, %s3
  %s6 = scalar_select 0, %s5, %s3
  $region1: #{dualnet_forward.1} parent=0
    #allocation2 [shape = 'u8[1024]{0}', space=vmem, size = 0x400, scoped, tag = 'input window, operand 0, single buffered']
    #allocation3 [shape = 's32[1]{0}', space=sflag, size = 0x4, scoped, tag = 'scoped memory for dualnet_forward.1']
    #allocation4 [shape = 'u8[274432]{0}', space=vmem, size = 0x43000, scoped, tag = 'input window, operand 1, single buffered']
    #allocation5 [shape = 's32[1]{0}', space=sflag, size = 0x4, scoped, tag = 'scoped memory for dualnet_forward.1']
    %7 = vsyncpa [#allocation3], 0
    %8 = vsyncpa [#allocation5], 0
    // Predicated region
    $region2: #{dualnet_forward.1} parent=1 // pred_check
      _
    $region3: #{dualnet_forward.1} parent=1 // pred_check_branch
      %10 = sbr.rel (0) target = $region5
    $region4: #{dualnet_forward.1} parent=1 // pred_region
      %s12 = ssub.s32 32, 32
      %13 = vsyncadd [#allocation3], %s12
      %s15 = sshll.u32 [#allocation2], 4
      %s16 = int_to_ptr.vmem [resolvable:$true] %s15
      %18 = dma.hbm_to_vmem [thread:$0]  %s0, 32, %s16, [#allocation3]
    $region5: #{dualnet_forward.1} parent=1 // pred_fallthru
      _
    // Predicated region
    $region6: #{dualnet_forward.1} parent=1 // pred_check
      _
    $region7: #{dualnet_forward.1} parent=1 // pred_check_branch
      %20 = sbr.rel (0) target = $region9
    $region8: #{dualnet_forward.1} parent=1 // pred_region
      %s22 = ssub.s32 8576, 8576
      %23 = vsyncadd [#allocation5], %s22
      %s24 = sshll.u32 [#allocation4], 4
      %s25 = int_to_ptr.vmem [resolvable:$true] %s24
      %30 = dma.hbm_to_vmem [thread:$0]  %s1, 8576, %s25, [#allocation5], 128, 128, 8
    $region9: #{dualnet_forward.1} parent=1 // pred_fallthru
      _
    // Predicated region
    $region10: #{dualnet_forward.1} parent=1 // pred_check
      _
    $region11: #{dualnet_forward.1} parent=1 // pred_check_branch
      %32 = sbr.rel (0) target = $region13
    $region12: #{dualnet_forward.1} parent=1 // pred_region
      %33 = dma.done [#allocation3], 32
    $region13: #{dualnet_forward.1} parent=1 // pred_fallthru
      _
    // Predicated region
    $region14: #{dualnet_forward.1} parent=1 // pred_check
      _
    $region15: #{dualnet_forward.1} parent=1 // pred_check_branch
      %35 = sbr.rel (0) target = $region17
    $region16: #{dualnet_forward.1} parent=1 // pred_region
      %36 = dma.done [#allocation5], 8576
    $region17: #{dualnet_forward.1} parent=1 // pred_fallthru
      _
    %v37 = vld [vmem:[#allocation2] sm:$0x3]
    %vm38 = vcmask 123904
    %v39 = vsel %vm38, %v37, 0.0
    %40 = vadd.xlane.f32.xlu0 %v39
    %v41 = vpop.xlane.xlu0 %40
    %v42 = vrcp.pop 16.0
    %v43 = vmul.f32 %v41, %v42
    %v44 = vsub.f32 %v37, %v43
    %v45 = vmul.f32 %v44, %v44
    %v46 = vsel %vm38, %v45, 0.0
    %47 = vadd.xlane.f32.xlu0 %v46
    %v48 = vpop.xlane.xlu0 %47
    %v49 = vmul.f32 %v48, %v42
    %v50 = vadd.f32 %v49, 1e-05
    %v51 = vrsqrt.pop %v50
    %v52 = vmul.f32 %v44, %v51
    %v53 = vld [vmem:[#allocation4] sm:$0xff]
    %v54 = vld [vmem:[#allocation4 + $0x8] sm:$0xff]
    %v55 = vld [vmem:[#allocation4 + $0x210] sm:$0x1]
    %v56 = vlaneseq
    %v57 = vshrl.u32 %v56, 7
    %v58 = vsub.s32 0, %v57
    %v59 = vrot.slane %v55, %v58
    %vm60 = vcmask 130048
    %v62 = vsel %vm60, %v52, 0
    %64 = vmatprep.subr.mxu0 0.0
    %65 = vmatpush1.msra.mxu0 0.0
    %66 = vmatprep.subr.mxu0 0.0
    %67 = vmatpush1.msra.mxu0 0.0
    %68 = vmatprep.subr.mxu0 0.0
    %69 = vmatpush1.msra.mxu0 0.0
    %70 = vmatprep.subr.mxu0 0.0
    %71 = vmatpush1.msra.mxu0 0.0
    %72 = vmatprep.subr.mxu0 0.0
    %73 = vmatpush1.msra.mxu0 0.0
    %74 = vmatprep.subr.mxu0 0.0
    %75 = vmatpush1.msra.mxu0 0.0
    %76 = vmatprep.subr.mxu0 0.0
    %77 = vmatpush1.msra.mxu0 0.0
    %78 = vmatprep.subr.mxu0 0.0
    %79 = vmatpush1.msra.mxu0 0.0
    %80 = vmatprep.subr.mxu0 0.0
    %81 = vmatpush1.msra.mxu0 0.0
    %82 = vmatprep.subr.mxu0 0.0
    %83 = vmatpush1.msra.mxu0 0.0
    %84 = vmatprep.subr.mxu0 0.0
    %85 = vmatpush1.msra.mxu0 0.0
    %86 = vmatprep.subr.mxu0 0.0
    %87 = vmatpush1.msra.mxu0 0.0
    %88 = vmatprep.subr.mxu0 0.0
    %89 = vmatpush1.msra.mxu0 0.0
    %90 = vmatprep.subr.mxu0 0.0
    %91 = vmatpush1.msra.mxu0 0.0
    %92 = vmatprep.subr.mxu0 0.0
    %93 = vmatpush1.msra.mxu0 %v54
    %94 = vmatprep.subr.mxu0 0.0
    %95 = vmatpush1.msra.mxu0 %v53
    %96 = vmatprep.subr.mxu0 0.0
    %97 = vmatpush2.msra.mxu0 0.0
    %98 = vmatprep.subr.mxu0 0.0
    %99 = vmatpush2.msra.mxu0 0.0
    %100 = vmatprep.subr.mxu0 0.0
    %101 = vmatpush2.msra.mxu0 0.0
    %102 = vmatprep.subr.mxu0 0.0
    %103 = vmatpush2.msra.mxu0 0.0
    %104 = vmatprep.subr.mxu0 0.0
    %105 = vmatpush2.msra.mxu0 0.0
    %106 = vmatprep.subr.mxu0 0.0
    %107 = vmatpush2.msra.mxu0 0.0
    %108 = vmatprep.subr.mxu0 0.0
    %109 = vmatpush2.msra.mxu0 0.0
    %110 = vmatprep.subr.mxu0 0.0
    %111 = vmatpush2.msra.mxu0 0.0
    %112 = vmatprep.subr.mxu0 0.0
    %113 = vmatpush2.msra.mxu0 0.0
    %114 = vmatprep.subr.mxu0 0.0
    %115 = vmatpush2.msra.mxu0 0.0
    %116 = vmatprep.subr.mxu0 0.0
    %117 = vmatpush2.msra.mxu0 0.0
    %118 = vmatprep.subr.mxu0 0.0
    %119 = vmatpush2.msra.mxu0 0.0
    %120 = vmatprep.subr.mxu0 0.0
    %121 = vmatpush2.msra.mxu0 0.0
    %122 = vmatprep.subr.mxu0 0.0
    %123 = vmatpush2.msra.mxu0 0.0
    %124 = vmatprep.subr.mxu0 0.0
    %125 = vmatpush2.msra.mxu0 0.0
    %126 = vmatprep.subr.mxu0 0.0
    %127 = vmatpush2.msra.mxu0 0.0
    %128 = vmatprep.mubr.f32.mxu0 0.0
    %129 = vmatmul.mubr.f32.gmra.mxu0 %v62
    %v130 = vpop.f32.mrf.mxu0
    %v131 = vadd.f32 %v59, %v130
    %v132 = vpop.f32.mrf.mxu0
    %133 = vdwg.mxu0
    %v134 = vmax.f32 %v131, 0.0
    %v135 = vld [vmem:[#allocation4 + $0x10] sm:$0xff]
    %v136 = vld [vmem:[#allocation4 + $0x18] sm:$0xff]
    %v137 = vld [vmem:[#allocation4 + $0x20] sm:$0xff]
    %v138 = vld [vmem:[#allocation4 + $0x28] sm:$0xff]
    %v139 = vld [vmem:[#allocation4 + $0x30] sm:$0xff]
    %v140 = vld [vmem:[#allocation4 + $0x38] sm:$0xff]
    %v141 = vld [vmem:[#allocation4 + $0x40] sm:$0xff]
    %v142 = vld [vmem:[#allocation4 + $0x48] sm:$0xff]
    %v143 = vld [vmem:[#allocation4 + $0x50] sm:$0xff]
    %v144 = vld [vmem:[#allocation4 + $0x58] sm:$0xff]
    %v145 = vld [vmem:[#allocation4 + $0x60] sm:$0xff]
    %v146 = vld [vmem:[#allocation4 + $0x68] sm:$0xff]
    %v147 = vld [vmem:[#allocation4 + $0x70] sm:$0xff]
    %v148 = vld [vmem:[#allocation4 + $0x78] sm:$0xff]
    %v149 = vld [vmem:[#allocation4 + $0x80] sm:$0xff]
    %v150 = vld [vmem:[#allocation4 + $0x88] sm:$0xff]
    %v151 = vld [vmem:[#allocation4 + $0x211] sm:$0x1]
    %v152 = vlaneseq
    %v153 = vshrl.u32 %v152, 7
    %v154 = vsub.s32 0, %v153
    %v155 = vrot.slane %v151, %v154
    %156 = vmatprep.subr.mxu0 0.0
    %157 = vmatpush1.msra.mxu0 %v150
    %158 = vmatprep.subr.mxu0 0.0
    %159 = vmatpush1.msra.mxu0 %v149
    %160 = vmatprep.subr.mxu0 0.0
    %161 = vmatpush1.msra.mxu0 %v148
    %162 = vmatprep.subr.mxu0 0.0
    %163 = vmatpush1.msra.mxu0 %v147
    %164 = vmatprep.subr.mxu0 0.0
    %165 = vmatpush1.msra.mxu0 %v146
    %166 = vmatprep.subr.mxu0 0.0
    %167 = vmatpush1.msra.mxu0 %v145
    %168 = vmatprep.subr.mxu0 0.0
    %169 = vmatpush1.msra.mxu0 %v144
    %170 = vmatprep.subr.mxu0 0.0
    %171 = vmatpush1.msra.mxu0 %v143
    %172 = vmatprep.subr.mxu0 0.0
    %173 = vmatpush1.msra.mxu0 %v142
    %174 = vmatprep.subr.mxu0 0.0
    %175 = vmatpush1.msra.mxu0 %v141
    %176 = vmatprep.subr.mxu0 0.0
    %177 = vmatpush1.msra.mxu0 %v140
    %178 = vmatprep.subr.mxu0 0.0
    %179 = vmatpush1.msra.mxu0 %v139
    %180 = vmatprep.subr.mxu0 0.0
    %181 = vmatpush1.msra.mxu0 %v138
    %182 = vmatprep.subr.mxu0 0.0
    %183 = vmatpush1.msra.mxu0 %v137
    %184 = vmatprep.subr.mxu0 0.0
    %185 = vmatpush1.msra.mxu0 %v136
    %186 = vmatprep.subr.mxu0 0.0
    %187 = vmatpush1.msra.mxu0 %v135
    %188 = vmatprep.subr.mxu0 0.0
    %189 = vmatpush2.msra.mxu0 0.0
    %190 = vmatprep.subr.mxu0 0.0
    %191 = vmatpush2.msra.mxu0 0.0
    %192 = vmatprep.subr.mxu0 0.0
    %193 = vmatpush2.msra.mxu0 0.0
    %194 = vmatprep.subr.mxu0 0.0
    %195 = vmatpush2.msra.mxu0 0.0
    %196 = vmatprep.subr.mxu0 0.0
    %197 = vmatpush2.msra.mxu0 0.0
    %198 = vmatprep.subr.mxu0 0.0
    %199 = vmatpush2.msra.mxu0 0.0
    %200 = vmatprep.subr.mxu0 0.0
    %201 = vmatpush2.msra.mxu0 0.0
    %202 = vmatprep.subr.mxu0 0.0
    %203 = vmatpush2.msra.mxu0 0.0
    %204 = vmatprep.subr.mxu0 0.0
    %205 = vmatpush2.msra.mxu0 0.0
    %206 = vmatprep.subr.mxu0 0.0
    %207 = vmatpush2.msra.mxu0 0.0
    %208 = vmatprep.subr.mxu0 0.0
    %209 = vmatpush2.msra.mxu0 0.0
    %210 = vmatprep.subr.mxu0 0.0
    %211 = vmatpush2.msra.mxu0 0.0
    %212 = vmatprep.subr.mxu0 0.0
    %213 = vmatpush2.msra.mxu0 0.0
    %214 = vmatprep.subr.mxu0 0.0
    %215 = vmatpush2.msra.mxu0 0.0
    %216 = vmatprep.subr.mxu0 0.0
    %217 = vmatpush2.msra.mxu0 0.0
    %218 = vmatprep.subr.mxu0 0.0
    %219 = vmatpush2.msra.mxu0 0.0
    %220 = vmatprep.mubr.f32.mxu0 0.0
    %221 = vmatmul.mubr.f32.gmra.mxu0 %v134
    %v222 = vpop.f32.mrf.mxu0
    %v223 = vadd.f32 %v155, %v222
    %v224 = vpop.f32.mrf.mxu0
    %225 = vdwg.mxu0
    %v226 = vmax.f32 %v223, 0.0
    %v227 = vld [vmem:[#allocation4 + $0x90] sm:$0xff]
    %v228 = vld [vmem:[#allocation4 + $0x98] sm:$0xff]
    %v229 = vld [vmem:[#allocation4 + $0xa0] sm:$0xff]
    %v230 = vld [vmem:[#allocation4 + $0xa8] sm:$0xff]
    %v231 = vld [vmem:[#allocation4 + $0xb0] sm:$0xff]
    %v232 = vld [vmem:[#allocation4 + $0xb8] sm:$0xff]
    %v233 = vld [vmem:[#allocation4 + $0xc0] sm:$0xff]
    %v234 = vld [vmem:[#allocation4 + $0xc8] sm:$0xff]
    %v235 = vld [vmem:[#allocation4 + $0xd0] sm:$0xff]
    %v236 = vld [vmem:[#allocation4 + $0xd8] sm:$0xff]
    %v237 = vld [vmem:[#allocation4 + $0xe0] sm:$0xff]
    %v238 = vld [vmem:[#allocation4 + $0xe8] sm:$0xff]
    %v239 = vld [vmem:[#allocation4 + $0xf0] sm:$0xff]
    %v240 = vld [vmem:[#allocation4 + $0xf8] sm:$0xff]
    %v241 = vld [vmem:[#allocation4 + $0x100] sm:$0xff]
    %v242 = vld [vmem:[#allocation4 + $0x108] sm:$0xff]
    %v243 = vld [vmem:[#allocation4 + $0x212] sm:$0x1]
    %v244 = vlaneseq
    %v245 = vshrl.u32 %v244, 7
    %v246 = vsub.s32 0, %v245
    %v247 = vrot.slane %v243, %v246
    %248 = vmatprep.subr.mxu0 0.0
    %249 = vmatpush1.msra.mxu0 %v242
    %250 = vmatprep.subr.mxu0 0.0
    %251 = vmatpush1.msra.mxu0 %v241
    %252 = vmatprep.subr.mxu0 0.0
    %253 = vmatpush1.msra.mxu0 %v240
    %254 = vmatprep.subr.mxu0 0.0
    %255 = vmatpush1.msra.mxu0 %v239
    %256 = vmatprep.subr.mxu0 0.0
    %257 = vmatpush1.msra.mxu0 %v238
    %258 = vmatprep.subr.mxu0 0.0
    %259 = vmatpush1.msra.mxu0 %v237
    %260 = vmatprep.subr.mxu0 0.0
    %261 = vmatpush1.msra.mxu0 %v236
    %262 = vmatprep.subr.mxu0 0.0
    %263 = vmatpush1.msra.mxu0 %v235
    %264 = vmatprep.subr.mxu0 0.0
    %265 = vmatpush1.msra.mxu0 %v234
    %266 = vmatprep.subr.mxu0 0.0
    %267 = vmatpush1.msra.mxu0 %v233
    %268 = vmatprep.subr.mxu0 0.0
    %269 = vmatpush1.msra.mxu0 %v232
    %270 = vmatprep.subr.mxu0 0.0
    %271 = vmatpush1.msra.mxu0 %v231
    %272 = vmatprep.subr.mxu0 0.0
    %273 = vmatpush1.msra.mxu0 %v230
    %274 = vmatprep.subr.mxu0 0.0
    %275 = vmatpush1.msra.mxu0 %v229
    %276 = vmatprep.subr.mxu0 0.0
    %277 = vmatpush1.msra.mxu0 %v228
    %278 = vmatprep.subr.mxu0 0.0
    %279 = vmatpush1.msra.mxu0 %v227
    %280 = vmatprep.subr.mxu0 0.0
    %281 = vmatpush2.msra.mxu0 0.0
    %282 = vmatprep.subr.mxu0 0.0
    %283 = vmatpush2.msra.mxu0 0.0
    %284 = vmatprep.subr.mxu0 0.0
    %285 = vmatpush2.msra.mxu0 0.0
    %286 = vmatprep.subr.mxu0 0.0
    %287 = vmatpush2.msra.mxu0 0.0
    %288 = vmatprep.subr.mxu0 0.0
    %289 = vmatpush2.msra.mxu0 0.0
    %290 = vmatprep.subr.mxu0 0.0
    %291 = vmatpush2.msra.mxu0 0.0
    %292 = vmatprep.subr.mxu0 0.0
    %293 = vmatpush2.msra.mxu0 0.0
    %294 = vmatprep.subr.mxu0 0.0
    %295 = vmatpush2.msra.mxu0 0.0
    %296 = vmatprep.subr.mxu0 0.0
    %297 = vmatpush2.msra.mxu0 0.0
    %298 = vmatprep.subr.mxu0 0.0
    %299 = vmatpush2.msra.mxu0 0.0
    %300 = vmatprep.subr.mxu0 0.0
    %301 = vmatpush2.msra.mxu0 0.0
    %302 = vmatprep.subr.mxu0 0.0
    %303 = vmatpush2.msra.mxu0 0.0
    %304 = vmatprep.subr.mxu0 0.0
    %305 = vmatpush2.msra.mxu0 0.0
    %306 = vmatprep.subr.mxu0 0.0
    %307 = vmatpush2.msra.mxu0 0.0
    %308 = vmatprep.subr.mxu0 0.0
    %309 = vmatpush2.msra.mxu0 0.0
    %310 = vmatprep.subr.mxu0 0.0
    %311 = vmatpush2.msra.mxu0 0.0
    %312 = vmatprep.mubr.f32.mxu0 0.0
    %313 = vmatmul.mubr.f32.gmra.mxu0 %v226
    %v314 = vpop.f32.mrf.mxu0
    %v315 = vadd.f32 %v247, %v314
    %v316 = vpop.f32.mrf.mxu0
    %317 = vdwg.mxu0
    %v318 = vmax.f32 %v315, 0.0
    %v319 = vld [vmem:[#allocation4 + $0x110] sm:$0xff]
    %v320 = vld [vmem:[#allocation4 + $0x118] sm:$0xff]
    %v321 = vld [vmem:[#allocation4 + $0x120] sm:$0xff]
    %v322 = vld [vmem:[#allocation4 + $0x128] sm:$0xff]
    %v323 = vld [vmem:[#allocation4 + $0x130] sm:$0xff]
    %v324 = vld [vmem:[#allocation4 + $0x138] sm:$0xff]
    %v325 = vld [vmem:[#allocation4 + $0x140] sm:$0xff]
    %v326 = vld [vmem:[#allocation4 + $0x148] sm:$0xff]
    %v327 = vld [vmem:[#allocation4 + $0x150] sm:$0xff]
    %v328 = vld [vmem:[#allocation4 + $0x158] sm:$0xff]
    %v329 = vld [vmem:[#allocation4 + $0x160] sm:$0xff]
    %v330 = vld [vmem:[#allocation4 + $0x168] sm:$0xff]
    %v331 = vld [vmem:[#allocation4 + $0x170] sm:$0xff]
    %v332 = vld [vmem:[#allocation4 + $0x178] sm:$0xff]
    %v333 = vld [vmem:[#allocation4 + $0x180] sm:$0xff]
    %v334 = vld [vmem:[#allocation4 + $0x188] sm:$0xff]
    %v335 = vld [vmem:[#allocation4 + $0x213] sm:$0x1]
    %v336 = vlaneseq
    %v337 = vshrl.u32 %v336, 7
    %v338 = vsub.s32 0, %v337
    %v339 = vrot.slane %v335, %v338
    %340 = vmatprep.subr.mxu0 0.0
    %341 = vmatpush1.msra.mxu0 %v334
    %342 = vmatprep.subr.mxu0 0.0
    %343 = vmatpush1.msra.mxu0 %v333
    %344 = vmatprep.subr.mxu0 0.0
    %345 = vmatpush1.msra.mxu0 %v332
    %346 = vmatprep.subr.mxu0 0.0
    %347 = vmatpush1.msra.mxu0 %v331
    %348 = vmatprep.subr.mxu0 0.0
    %349 = vmatpush1.msra.mxu0 %v330
    %350 = vmatprep.subr.mxu0 0.0
    %351 = vmatpush1.msra.mxu0 %v329
    %352 = vmatprep.subr.mxu0 0.0
    %353 = vmatpush1.msra.mxu0 %v328
    %354 = vmatprep.subr.mxu0 0.0
    %355 = vmatpush1.msra.mxu0 %v327
    %356 = vmatprep.subr.mxu0 0.0
    %357 = vmatpush1.msra.mxu0 %v326
    %358 = vmatprep.subr.mxu0 0.0
    %359 = vmatpush1.msra.mxu0 %v325
    %360 = vmatprep.subr.mxu0 0.0
    %361 = vmatpush1.msra.mxu0 %v324
    %362 = vmatprep.subr.mxu0 0.0
    %363 = vmatpush1.msra.mxu0 %v323
    %364 = vmatprep.subr.mxu0 0.0
    %365 = vmatpush1.msra.mxu0 %v322
    %366 = vmatprep.subr.mxu0 0.0
    %367 = vmatpush1.msra.mxu0 %v321
    %368 = vmatprep.subr.mxu0 0.0
    %369 = vmatpush1.msra.mxu0 %v320
    %370 = vmatprep.subr.mxu0 0.0
    %371 = vmatpush1.msra.mxu0 %v319
    %372 = vmatprep.subr.mxu0 0.0
    %373 = vmatpush2.msra.mxu0 0.0
    %374 = vmatprep.subr.mxu0 0.0
    %375 = vmatpush2.msra.mxu0 0.0
    %376 = vmatprep.subr.mxu0 0.0
    %377 = vmatpush2.msra.mxu0 0.0
    %378 = vmatprep.subr.mxu0 0.0
    %379 = vmatpush2.msra.mxu0 0.0
    %380 = vmatprep.subr.mxu0 0.0
    %381 = vmatpush2.msra.mxu0 0.0
    %382 = vmatprep.subr.mxu0 0.0
    %383 = vmatpush2.msra.mxu0 0.0
    %384 = vmatprep.subr.mxu0 0.0
    %385 = vmatpush2.msra.mxu0 0.0
    %386 = vmatprep.subr.mxu0 0.0
    %387 = vmatpush2.msra.mxu0 0.0
    %388 = vmatprep.subr.mxu0 0.0
    %389 = vmatpush2.msra.mxu0 0.0
    %390 = vmatprep.subr.mxu0 0.0
    %391 = vmatpush2.msra.mxu0 0.0
    %392 = vmatprep.subr.mxu0 0.0
    %393 = vmatpush2.msra.mxu0 0.0
    %394 = vmatprep.subr.mxu0 0.0
    %395 = vmatpush2.msra.mxu0 0.0
    %396 = vmatprep.subr.mxu0 0.0
    %397 = vmatpush2.msra.mxu0 0.0
    %398 = vmatprep.subr.mxu0 0.0
    %399 = vmatpush2.msra.mxu0 0.0
    %400 = vmatprep.subr.mxu0 0.0
    %401 = vmatpush2.msra.mxu0 0.0
    %402 = vmatprep.subr.mxu0 0.0
    %403 = vmatpush2.msra.mxu0 0.0
    %404 = vmatprep.mubr.f32.mxu0 0.0
    %405 = vmatmul.mubr.f32.gmra.mxu0 %v318
    %v406 = vpop.f32.mrf.mxu0
    %v407 = vadd.f32 %v339, %v406
    %v408 = vpop.f32.mrf.mxu0
    %409 = vdwg.mxu0
    %v410 = vmax.f32 %v407, 0.0
    %v411 = vld [vmem:[#allocation4 + $0x190] sm:$0xff]
    %v412 = vld [vmem:[#allocation4 + $0x198] sm:$0xff]
    %v413 = vld [vmem:[#allocation4 + $0x1a0] sm:$0xff]
    %v414 = vld [vmem:[#allocation4 + $0x1a8] sm:$0xff]
    %v415 = vld [vmem:[#allocation4 + $0x1b0] sm:$0xff]
    %v416 = vld [vmem:[#allocation4 + $0x1b8] sm:$0xff]
    %v417 = vld [vmem:[#allocation4 + $0x1c0] sm:$0xff]
    %v418 = vld [vmem:[#allocation4 + $0x1c8] sm:$0xff]
    %v419 = vld [vmem:[#allocation4 + $0x1d0] sm:$0xff]
    %v420 = vld [vmem:[#allocation4 + $0x1d8] sm:$0xff]
    %v421 = vld [vmem:[#allocation4 + $0x1e0] sm:$0xff]
    %v422 = vld [vmem:[#allocation4 + $0x1e8] sm:$0xff]
    %v423 = vld [vmem:[#allocation4 + $0x1f0] sm:$0xff]
    %v424 = vld [vmem:[#allocation4 + $0x1f8] sm:$0xff]
    %v425 = vld [vmem:[#allocation4 + $0x200] sm:$0xff]
    %v426 = vld [vmem:[#allocation4 + $0x208] sm:$0xff]
    %v427 = vld [vmem:[#allocation4 + $0x214] sm:$0x1]
    %v428 = vlaneseq
    %v429 = vshrl.u32 %v428, 7
    %v430 = vsub.s32 0, %v429
    %v431 = vrot.slane %v427, %v430
    %432 = vmatprep.subr.mxu0 0.0
    %433 = vmatpush1.msra.mxu0 %v426
    %434 = vmatprep.subr.mxu0 0.0
    %435 = vmatpush1.msra.mxu0 %v425
    %436 = vmatprep.subr.mxu0 0.0
    %437 = vmatpush1.msra.mxu0 %v424
    %438 = vmatprep.subr.mxu0 0.0
    %439 = vmatpush1.msra.mxu0 %v423
    %440 = vmatprep.subr.mxu0 0.0
    %441 = vmatpush1.msra.mxu0 %v422
    %442 = vmatprep.subr.mxu0 0.0
    %443 = vmatpush1.msra.mxu0 %v421
    %444 = vmatprep.subr.mxu0 0.0
    %445 = vmatpush1.msra.mxu0 %v420
    %446 = vmatprep.subr.mxu0 0.0
    %447 = vmatpush1.msra.mxu0 %v419
    %448 = vmatprep.subr.mxu0 0.0
    %449 = vmatpush1.msra.mxu0 %v418
    %450 = vmatprep.subr.mxu0 0.0
    %451 = vmatpush1.msra.mxu0 %v417
    %452 = vmatprep.subr.mxu0 0.0
    %453 = vmatpush1.msra.mxu0 %v416
    %454 = vmatprep.subr.mxu0 0.0
    %455 = vmatpush1.msra.mxu0 %v415
    %456 = vmatprep.subr.mxu0 0.0
    %457 = vmatpush1.msra.mxu0 %v414
    %458 = vmatprep.subr.mxu0 0.0
    %459 = vmatpush1.msra.mxu0 %v413
    %460 = vmatprep.subr.mxu0 0.0
    %461 = vmatpush1.msra.mxu0 %v412
    %462 = vmatprep.subr.mxu0 0.0
    %463 = vmatpush1.msra.mxu0 %v411
    %464 = vmatprep.subr.mxu0 0.0
    %465 = vmatpush2.msra.mxu0 0.0
    %466 = vmatprep.subr.mxu0 0.0
    %467 = vmatpush2.msra.mxu0 0.0
    %468 = vmatprep.subr.mxu0 0.0
    %469 = vmatpush2.msra.mxu0 0.0
    %470 = vmatprep.subr.mxu0 0.0
    %471 = vmatpush2.msra.mxu0 0.0
    %472 = vmatprep.subr.mxu0 0.0
    %473 = vmatpush2.msra.mxu0 0.0
    %474 = vmatprep.subr.mxu0 0.0
    %475 = vmatpush2.msra.mxu0 0.0
    %476 = vmatprep.subr.mxu0 0.0
    %477 = vmatpush2.msra.mxu0 0.0
    %478 = vmatprep.subr.mxu0 0.0
    %479 = vmatpush2.msra.mxu0 0.0
    %480 = vmatprep.subr.mxu0 0.0
    %481 = vmatpush2.msra.mxu0 0.0
    %482 = vmatprep.subr.mxu0 0.0
    %483 = vmatpush2.msra.mxu0 0.0
    %484 = vmatprep.subr.mxu0 0.0
    %485 = vmatpush2.msra.mxu0 0.0
    %486 = vmatprep.subr.mxu0 0.0
    %487 = vmatpush2.msra.mxu0 0.0
    %488 = vmatprep.subr.mxu0 0.0
    %489 = vmatpush2.msra.mxu0 0.0
    %490 = vmatprep.subr.mxu0 0.0
    %491 = vmatpush2.msra.mxu0 0.0
    %492 = vmatprep.subr.mxu0 0.0
    %493 = vmatpush2.msra.mxu0 0.0
    %494 = vmatprep.subr.mxu0 0.0
    %495 = vmatpush2.msra.mxu0 0.0
    %496 = vmatprep.mubr.f32.mxu0 0.0
    %497 = vmatmul.mubr.f32.gmra.mxu0 %v410
    %v498 = vpop.f32.mrf.mxu0
    %v499 = vadd.f32 %v431, %v498
    %v500 = vpop.f32.mrf.mxu0
    %501 = vdwg.mxu0
    %v502 = vlaneseq
    %v503 = vand.u32 %v502, 127
    %vm504 = vcmp.lt.s32.totalorder %v503, 32
    %v505 = vmax.f32 %v499, 0.0
    %v506 = vsel %vm504, %v505, %v499
    %507 = vst [vmem:[%s2] sm:$0x3] %v506
    // Predicated region
    $region18: #{dualnet_forward.1} parent=1 // pred_check
      _
    $region19: #{dualnet_forward.1} parent=1 // pred_check_branch
      %509 = sbr.rel (0) target = $region21
    $region20: #{dualnet_forward.1} parent=1 // pred_region
      _
    $region21: #{dualnet_forward.1} parent=1 // pred_fallthru
      _
    // Predicated region
    $region22: #{dualnet_forward.1} parent=1 // pred_check
      _
    $region23: #{dualnet_forward.1} parent=1 // pred_check_branch
      %511 = sbr.rel (0) target = $region25
    $region24: #{dualnet_forward.1} parent=1 // pred_region
      _
    $region25: #{dualnet_forward.1} parent=1 // pred_fallthru
      _
    %512 = vsyncpa [#allocation3], 1
    %513 = vsyncpa [#allocation5], 1

</llo_original>
